<compile_context>
chip_gen: v5e
topology: v5e:2x2
jax: 0.10.0
libtpu: 0.0.40
codegen_flags: <defaults>
</compile_context>

<pallas_src>
import math
from functools import partial

import jax
import jax.numpy as jnp
from jax import lax
from jax.experimental import pallas as pl
from jax.experimental.pallas import tpu as pltpu


def _round_up(v, m):
    return ((v + m - 1) // m) * m


def _adacos_kernel(x_ref, w_ref, o_ref, xs_ref, *, scale, eps, matmul_dtype):
    j = pl.program_id(1)

    # Compute the scaled, L2-normalized x tile once per batch tile and cache it
    # in VMEM scratch (persists across the inner class-tile axis).
    @pl.when(j == 0)
    def _():
        x = x_ref[...].astype(jnp.float32)
        # F.normalize semantics: x / max(||x||, eps) == x * rsqrt(max(||x||^2, eps^2)).
        inv_x = lax.rsqrt(
            jnp.maximum(jnp.sum(x * x, axis=-1, keepdims=True), eps * eps)
        )
        # Fold the fixed AdaCos scale into the small [tm, D] tile here (cost is
        # amortized over all class tiles of this batch tile).
        xs_ref[...] = (x * (scale * inv_x)).astype(xs_ref.dtype)

    w_raw = w_ref[...]
    w = w_raw.astype(jnp.float32)

    # Inverse L2 norm per class row: [tn].  rsqrt -> EUP slot.
    inv_w = lax.rsqrt(jnp.maximum(jnp.sum(w * w, axis=-1), eps * eps))

    # Contract the feature (last) dim of both operands directly on the MXU —
    # no transpose of the W tile, f32 accumulation.
    acc = lax.dot_general(
        xs_ref[...],
        w_raw.astype(matmul_dtype),
        dimension_numbers=(((1,), (1,)), ((), ())),
        preferred_element_type=jnp.float32,
    )

    # Column-scale the [tm, tn] result by inv_w instead of elementwise-scaling
    # the [tn, D] weight tile (fewer VPU ops when D > tm).
    o_ref[...] = (acc * inv_w[None, :]).astype(o_ref.dtype)


def partial_fc_header(x, weight, *, eps=1e-12, use_bf16_matmul=False):
    """x: [B, D] features, weight: [C, D] class prototypes -> [B, C] logits."""
    B, D = x.shape
    C, D2 = weight.shape
    assert D == D2, "feature dims must match"

    # Fixed AdaCos scale (label-free path).  Note: 0 for C == 2.
    scale = math.sqrt(2.0) * math.log(C - 1)

    # Tile selection: lane-dense class tiles (multiple of 128, capped at 512),
    # batch tiles a multiple of 8 (f32 sublane), capped at 128.  D stays
    # untiled so norms are exact per row.
    tm = min(128, _round_up(B, 8))
    tn = min(512, _round_up(C, 128))
    b_pad = _round_up(B, tm)
    c_pad = _round_up(C, tn)

    x_p = x if b_pad == B else jnp.pad(x, ((0, b_pad - B), (0, 0)))
    w_p = weight if c_pad == C else jnp.pad(weight, ((0, c_pad - C), (0, 0)))

    matmul_dtype = jnp.bfloat16 if use_bf16_matmul else jnp.float32
    kernel = partial(
        _adacos_kernel, scale=scale, eps=eps, matmul_dtype=matmul_dtype
    )

    out = pl.pallas_call(
        kernel,
        out_shape=jax.ShapeDtypeStruct((b_pad, c_pad), jnp.float32),
        grid=(b_pad // tm, c_pad // tn),
        in_specs=[
            pl.BlockSpec((tm, D), lambda i, j: (i, 0)),
            pl.BlockSpec((tn, D), lambda i, j: (j, 0)),
        ],
        out_specs=pl.BlockSpec((tm, tn), lambda i, j: (i, j)),
        scratch_shapes=[pltpu.VMEM((tm, D), matmul_dtype)],
        compiler_params=pltpu.CompilerParams(
            # Class axis carries the cached-x scratch -> "arbitrary"; batch
            # axis is independent -> "parallel" (megacore sharding on v7x).
            dimension_semantics=("parallel", "arbitrary"),
        ),
    )(x_p, w_p)

    return out[:B, :C]


def partial_fc_header_ref(x, weight, *, eps=1e-12):
    """Pure-JAX reference for correctness checking."""
    C = weight.shape[0]
    scale = math.sqrt(2.0) * math.log(C - 1)
    x_n = x / jnp.maximum(jnp.linalg.norm(x, axis=-1, keepdims=True), eps)
    w_n = weight / jnp.maximum(
        jnp.linalg.norm(weight, axis=-1, keepdims=True), eps
    )
    return scale * (x_n @ w_n.T)


if __name__ == "__main__":
    key = jax.random.PRNGKey(0)
    k_x, k_w = jax.random.split(key)

    # Small shapes consistent with the header: batch=8, feat=32, classes=16.
    B, D, C = 8, 32, 16
    x = jax.random.normal(k_x, (B, D), dtype=jnp.float32)
    weight = jax.random.normal(k_w, (C, D), dtype=jnp.float32) * (
        1.0 / math.sqrt(D)
    )

    out = jax.block_until_ready(partial_fc_header(x, weight))
    ref = partial_fc_header_ref(x, weight)
    assert out.shape == (B, C)
    assert jnp.allclose(out, ref, atol=1e-4, rtol=1e-4)

    # bf16-operand MXU path (f32 accumulation) — looser tolerance.
    out_bf16 = jax.block_until_ready(
        partial_fc_header(x, weight, use_bf16_matmul=True)
    )
    assert jnp.allclose(out_bf16, ref, atol=5e-2, rtol=5e-2)

    # Second check exercising a real (2, 2) grid with non-aligned B / C
    # (padding + slicing path, and the cached-x scratch across class tiles).
    B2, D2_, C2 = 160, 64, 700
    k_x2, k_w2 = jax.random.split(jax.random.PRNGKey(1))
    x2 = jax.random.normal(k_x2, (B2, D2_), dtype=jnp.float32)
    w2 = jax.random.normal(k_w2, (C2, D2_), dtype=jnp.float32) * (
        1.0 / math.sqrt(D2_)
    )
    out2 = jax.block_until_ready(partial_fc_header(x2, w2))
    ref2 = partial_fc_header_ref(x2, w2)
    assert out2.shape == (B2, C2)
    assert jnp.allclose(out2, ref2, atol=1e-3, rtol=1e-3)

    print("KERNEL_OK")
</pallas_src>

<mosaic_0001>
module attributes {stable_mosaic.version = 11 : i64} {
  func.func @_adacos_kernel(%arg0: i32, %arg1: i32, %arg2: memref<8x32xf32, #tpu.memory_space<vmem>>, %arg3: memref<128x32xf32, #tpu.memory_space<vmem>>, %arg4: memref<8x128xf32, #tpu.memory_space<vmem>>, %arg5: memref<8x32xf32, #tpu.memory_space<vmem>>) attributes {dimension_semantics = [#tpu.dimension_semantics<parallel>, #tpu.dimension_semantics<arbitrary>], iteration_bounds = array<i64: 1, 1>, scalar_prefetch = 0 : i64, scratch_operands = 1 : i64, tpu.core_type = #tpu.core_type<tc>, window_params = [{transform_indices = @transform_0, window_bounds = array<i64: 8, 32>}, {transform_indices = @transform_1, window_bounds = array<i64: 128, 32>}, {transform_indices = @transform_2, window_bounds = array<i64: 8, 128>}]} {
    %c0_i32 = arith.constant 0 : i32
    %0 = arith.cmpi eq, %arg1, %c0_i32 : i32
    %1 = arith.extui %0 : i1 to i32
    %c0_i32_0 = arith.constant 0 : i32
    %2 = arith.cmpi ne, %1, %c0_i32_0 : i32
    scf.if %2 {
      %c0_8 = arith.constant 0 : index
      %c0_9 = arith.constant 0 : index
      %15 = vector.load %arg2[%c0_8, %c0_9] : memref<8x32xf32, #tpu.memory_space<vmem>>, vector<8x32xf32>
      %16 = arith.mulf %15, %15 : vector<8x32xf32>
      %cst_10 = arith.constant dense<0.000000e+00> : vector<8xf32>
      %17 = vector.multi_reduction <add>, %16, %cst_10 [1] : vector<8x32xf32> to vector<8xf32>
      %18 = vector.shape_cast %17 : vector<8xf32> to vector<8x1xf32>
      %cst_11 = arith.constant 1.000000e-24 : f32
      %19 = vector.broadcast %cst_11 : f32 to vector<8x1xf32>
      %20 = arith.maximumf %18, %19 : vector<8x1xf32>
      %21 = math.rsqrt %20 : vector<8x1xf32>
      %cst_12 = arith.constant 3.82976127 : f32
      %22 = vector.broadcast %cst_12 : f32 to vector<8x1xf32>
      %23 = arith.mulf %22, %21 : vector<8x1xf32>
      %24 = vector.broadcast %23 : vector<8x1xf32> to vector<8x32xf32>
      %25 = arith.mulf %15, %24 : vector<8x32xf32>
      %c0_13 = arith.constant 0 : index
      %c0_14 = arith.constant 0 : index
      %26 = vector.load %arg5[%c0_13, %c0_14] : memref<8x32xf32, #tpu.memory_space<vmem>>, vector<8x32xf32>
      tpu.vector_store %arg5[%c0_13, %c0_14], %25 {strides = array<i32>} : memref<8x32xf32, #tpu.memory_space<vmem>>, vector<8x32xf32>,
    } else {
    }
    %c0 = arith.constant 0 : index
    %c0_1 = arith.constant 0 : index
    %3 = vector.load %arg3[%c0, %c0_1] : memref<128x32xf32, #tpu.memory_space<vmem>>, vector<128x32xf32>
    %4 = arith.mulf %3, %3 : vector<128x32xf32>
    %cst = arith.constant dense<0.000000e+00> : vector<128xf32>
    %5 = vector.multi_reduction <add>, %4, %cst [1] : vector<128x32xf32> to vector<128xf32>
    %cst_2 = arith.constant 1.000000e-24 : f32
    %6 = vector.broadcast %cst_2 : f32 to vector<128xf32>
    %7 = arith.maximumf %5, %6 : vector<128xf32>
    %8 = math.rsqrt %7 : vector<128xf32>
    %c0_3 = arith.constant 0 : index
    %c0_4 = arith.constant 0 : index
    %9 = vector.load %arg5[%c0_3, %c0_4] : memref<8x32xf32, #tpu.memory_space<vmem>>, vector<8x32xf32>
    %cst_5 = arith.constant dense<0.000000e+00> : vector<8x128xf32>
    %10 = tpu.matmul %9, %3, %cst_5 {dimension_numbers = #tpu.dot_dimension_numbers<[1], [1], [0], [0], [0, 0, 1, 0], [], []>} : vector<8x32xf32>, vector<128x32xf32>, vector<8x128xf32> -> vector<8x128xf32>
    %11 = vector.shape_cast %8 : vector<128xf32> to vector<1x128xf32>
    %12 = vector.broadcast %11 : vector<1x128xf32> to vector<8x128xf32>
    %13 = arith.mulf %10, %12 : vector<8x128xf32>
    %c0_6 = arith.constant 0 : index
    %c0_7 = arith.constant 0 : index
    %14 = vector.load %arg4[%c0_6, %c0_7] : memref<8x128xf32, #tpu.memory_space<vmem>>, vector<8x128xf32>
    tpu.vector_store %arg4[%c0_6, %c0_7], %13 {strides = array<i32>} : memref<8x128xf32, #tpu.memory_space<vmem>>, vector<8x128xf32>,
    return
  }
  func.func @transform_0(%arg0: i32, %arg1: i32) -> (i32, i32) {
    %c0_i32 = arith.constant 0 : i32
    %c0_i32_0 = arith.constant 0 : i32
    return %arg0, %c0_i32 : i32, i32
  }
  func.func @transform_1(%arg0: i32, %arg1: i32) -> (i32, i32) {
    %c0_i32 = arith.constant 0 : i32
    %c0_i32_0 = arith.constant 0 : i32
    return %arg1, %c0_i32 : i32, i32
  }
  func.func @transform_2(%arg0: i32, %arg1: i32) -> (i32, i32) {
    %c0_i32 = arith.constant 0 : i32
    return %arg0, %arg1 : i32, i32
  }
}

</mosaic_0001>

<llo_original>
// kernel: tpu_custom_call.1
$region0: #{tpu_custom_call.1}
  #allocation0 [shape = 'u32[]', space=smem, size = 0x4, offset = 0x4, fixed_abs, tag = 'smem constant byte address 0x4 - core index']
  #allocation1 [shape = 'u32[72,128]{1,0:T(1,128)}', space=vmem, size = 0x9000, scoped, tag = 'internal scratch']
  #allocation2 [shape = 'f32[8,32]{1,0:T(8,128)}', space=vmem, size = 0x1000, scoped, tag = 'scratch operand']
  %s0 = inlined_call_operand.vmem [shape: f32[8,32], index: 0, kind: input, shape index: {}]
  %s1 = inlined_call_operand.vmem [shape: f32[128,32], index: 1, kind: input, shape index: {}]
  %s2 = inlined_call_operand.hbm [shape: f32[8,128], index: 2, kind: output, shape index: {}]
  %s3 = sld [smem:[#allocation0]]
  $region22: #{tpu_custom_call.1} parent=0
    _
  %s5 = ssub.s32 1, %s3
  %s6 = scalar_select 0, %s5, %s3
  $region1: #{tpu_custom_call.1} parent=0
    #allocation3 [shape = 'u8[4096]{0}', space=vmem, size = 0x1000, scoped, tag = 'output window, operand 0, single buffered']
    #allocation4 [shape = 's32[1]{0}', space=sflag, size = 0x4, scoped, tag = 'scoped memory for tpu_custom_call.1']
    %7 = vsyncpa [#allocation4], 0
    // Predicated region
    $region2: #{tpu_custom_call.1} parent=1 // pred_check
      _
    $region3: #{tpu_custom_call.1} parent=1 // pred_check_branch
      %9 = sbr.rel (0) target = $region5
    $region4: #{tpu_custom_call.1} parent=1 // pred_region
      _
    $region5: #{tpu_custom_call.1} parent=1 // pred_fallthru
      _
    // Predicated region
    $region6: #{tpu_custom_call.1} parent=1 // pred_check
      _
    $region7: #{tpu_custom_call.1} parent=1 // pred_check_branch
      %11 = sbr.rel (0) target = $region9
    $region8: #{tpu_custom_call.1} parent=1 // pred_region
      _
    $region9: #{tpu_custom_call.1} parent=1 // pred_fallthru
      _
    %p12 = scmp.eq.s32.totalorder 0, 0
    // Predicated region
    $region10: #{tpu_custom_call.1} parent=1 // pred_check
      %p13 = pneg %p12
    $region11: #{tpu_custom_call.1} parent=1 // pred_check_branch
      %15 = sbr.rel (%p13) target = $region13
    $region12: #{tpu_custom_call.1} parent=1 // pred_region
      %v16 = vld [vmem:[%s0] sm:$0xff]
      %v17 = vmul.f32 %v16, %v16
      %vm18 = vcmask 261120
      %v19 = vsel %vm18, %v17, 0.0
      %20 = vadd.xlane.f32.xlu0 %v19
      %v21 = vpop.xlane.xlu0 %20
      %v22 = vmax.f32 %v21, 1e-24
      %v23 = vrsqrt.pop %v22
      %v24 = vmul.f32 %v23, %v22
      %v25 = vmul.f32 %v24, %v23
      %v26 = vmul.f32 0.5, %v25
      %v27 = vsub.f32 1.5, %v26
      %v28 = vmul.f32 %v23, %v27
      %vm29 = vweird.f32 %v22
      %vm30 = vweird.f32 %v23
      %vm31 = vmor %vm29, %vm30
      %v32 = vsel %vm31, %v23, %v28
      %v33 = vmul.f32 %v32, 3.8297613
      %v34 = vmul.f32 %v16, %v33
      %35 = vst.msk [vmem:[#allocation2] sm:$0xff] %vm18, %v34
    $region13: #{tpu_custom_call.1} parent=1 // pred_fallthru
      _
    %v36 = vld [vmem:[%s1] sm:$0xff]
    %v37 = vld [vmem:[%s1 + $0x8] sm:$0xff]
    %v38 = vld [vmem:[%s1 + $0x10] sm:$0xff]
    %v39 = vld [vmem:[%s1 + $0x18] sm:$0xff]
    %v40 = vld [vmem:[%s1 + $0x20] sm:$0xff]
    %v41 = vld [vmem:[%s1 + $0x28] sm:$0xff]
    %v42 = vld [vmem:[%s1 + $0x30] sm:$0xff]
    %v43 = vld [vmem:[%s1 + $0x38] sm:$0xff]
    %v44 = vld [vmem:[%s1 + $0x40] sm:$0xff]
    %v45 = vld [vmem:[%s1 + $0x48] sm:$0xff]
    %v46 = vld [vmem:[%s1 + $0x50] sm:$0xff]
    %v47 = vld [vmem:[%s1 + $0x58] sm:$0xff]
    %v48 = vld [vmem:[%s1 + $0x60] sm:$0xff]
    %v49 = vld [vmem:[%s1 + $0x68] sm:$0xff]
    %v50 = vld [vmem:[%s1 + $0x70] sm:$0xff]
    %v51 = vld [vmem:[%s1 + $0x78] sm:$0xff]
    %v52 = vmul.f32 %v36, %v36
    %v53 = vmul.f32 %v37, %v37
    %v54 = vmul.f32 %v38, %v38
    %v55 = vmul.f32 %v39, %v39
    %v56 = vmul.f32 %v40, %v40
    %v57 = vmul.f32 %v41, %v41
    %v58 = vmul.f32 %v42, %v42
    %v59 = vmul.f32 %v43, %v43
    %v60 = vmul.f32 %v44, %v44
    %v61 = vmul.f32 %v45, %v45
    %v62 = vmul.f32 %v46, %v46
    %v63 = vmul.f32 %v47, %v47
    %v64 = vmul.f32 %v48, %v48
    %v65 = vmul.f32 %v49, %v49
    %v66 = vmul.f32 %v50, %v50
    %v67 = vmul.f32 %v51, %v51
    %vm68 = vcmask 261120
    %v69 = vsel %vm68, %v52, 0.0
    %70 = vadd.xlane.f32.xlu0 %v69
    %v71 = vpop.xlane.xlu0 %70
    %v72 = vsel %vm68, %v53, 0.0
    %73 = vadd.xlane.f32.xlu0 %v72
    %v74 = vpop.xlane.xlu0 %73
    %v75 = vsel %vm68, %v54, 0.0
    %76 = vadd.xlane.f32.xlu0 %v75
    %v77 = vpop.xlane.xlu0 %76
    %v78 = vsel %vm68, %v55, 0.0
    %79 = vadd.xlane.f32.xlu0 %v78
    %v80 = vpop.xlane.xlu0 %79
    %v81 = vsel %vm68, %v56, 0.0
    %82 = vadd.xlane.f32.xlu0 %v81
    %v83 = vpop.xlane.xlu0 %82
    %v84 = vsel %vm68, %v57, 0.0
    %85 = vadd.xlane.f32.xlu0 %v84
    %v86 = vpop.xlane.xlu0 %85
    %v87 = vsel %vm68, %v58, 0.0
    %88 = vadd.xlane.f32.xlu0 %v87
    %v89 = vpop.xlane.xlu0 %88
    %v90 = vsel %vm68, %v59, 0.0
    %91 = vadd.xlane.f32.xlu0 %v90
    %v92 = vpop.xlane.xlu0 %91
    %v93 = vsel %vm68, %v60, 0.0
    %94 = vadd.xlane.f32.xlu0 %v93
    %v95 = vpop.xlane.xlu0 %94
    %v96 = vsel %vm68, %v61, 0.0
    %97 = vadd.xlane.f32.xlu0 %v96
    %v98 = vpop.xlane.xlu0 %97
    %v99 = vsel %vm68, %v62, 0.0
    %100 = vadd.xlane.f32.xlu0 %v99
    %v101 = vpop.xlane.xlu0 %100
    %v102 = vsel %vm68, %v63, 0.0
    %103 = vadd.xlane.f32.xlu0 %v102
    %v104 = vpop.xlane.xlu0 %103
    %v105 = vsel %vm68, %v64, 0.0
    %106 = vadd.xlane.f32.xlu0 %v105
    %v107 = vpop.xlane.xlu0 %106
    %v108 = vsel %vm68, %v65, 0.0
    %109 = vadd.xlane.f32.xlu0 %v108
    %v110 = vpop.xlane.xlu0 %109
    %v111 = vsel %vm68, %v66, 0.0
    %112 = vadd.xlane.f32.xlu0 %v111
    %v113 = vpop.xlane.xlu0 %112
    %v114 = vsel %vm68, %v67, 0.0
    %115 = vadd.xlane.f32.xlu0 %v114
    %v116 = vpop.xlane.xlu0 %115
    %v117 = vmax.f32 %v71, 1e-24
    %v118 = vmax.f32 %v74, 1e-24
    %v119 = vmax.f32 %v77, 1e-24
    %v120 = vmax.f32 %v80, 1e-24
    %v121 = vmax.f32 %v83, 1e-24
    %v122 = vmax.f32 %v86, 1e-24
    %v123 = vmax.f32 %v89, 1e-24
    %v124 = vmax.f32 %v92, 1e-24
    %v125 = vmax.f32 %v95, 1e-24
    %v126 = vmax.f32 %v98, 1e-24
    %v127 = vmax.f32 %v101, 1e-24
    %v128 = vmax.f32 %v104, 1e-24
    %v129 = vmax.f32 %v107, 1e-24
    %v130 = vmax.f32 %v110, 1e-24
    %v131 = vmax.f32 %v113, 1e-24
    %v132 = vmax.f32 %v116, 1e-24
    %v133 = vrsqrt.pop %v117
    %v134 = vmul.f32 %v133, %v117
    %v135 = vmul.f32 %v134, %v133
    %v136 = vmul.f32 0.5, %v135
    %v137 = vsub.f32 1.5, %v136
    %v138 = vmul.f32 %v133, %v137
    %vm139 = vweird.f32 %v117
    %vm140 = vweird.f32 %v133
    %vm141 = vmor %vm139, %vm140
    %v142 = vsel %vm141, %v133, %v138
    %v143 = vrsqrt.pop %v118
    %v144 = vmul.f32 %v143, %v118
    %v145 = vmul.f32 %v144, %v143
    %v146 = vmul.f32 0.5, %v145
    %v147 = vsub.f32 1.5, %v146
    %v148 = vmul.f32 %v143, %v147
    %vm149 = vweird.f32 %v118
    %vm150 = vweird.f32 %v143
    %vm151 = vmor %vm149, %vm150
    %v152 = vsel %vm151, %v143, %v148
    %v153 = vrsqrt.pop %v119
    %v154 = vmul.f32 %v153, %v119
    %v155 = vmul.f32 %v154, %v153
    %v156 = vmul.f32 0.5, %v155
    %v157 = vsub.f32 1.5, %v156
    %v158 = vmul.f32 %v153, %v157
    %vm159 = vweird.f32 %v119
    %vm160 = vweird.f32 %v153
    %vm161 = vmor %vm159, %vm160
    %v162 = vsel %vm161, %v153, %v158
    %v163 = vrsqrt.pop %v120
    %v164 = vmul.f32 %v163, %v120
    %v165 = vmul.f32 %v164, %v163
    %v166 = vmul.f32 0.5, %v165
    %v167 = vsub.f32 1.5, %v166
    %v168 = vmul.f32 %v163, %v167
    %vm169 = vweird.f32 %v120
    %vm170 = vweird.f32 %v163
    %vm171 = vmor %vm169, %vm170
    %v172 = vsel %vm171, %v163, %v168
    %v173 = vrsqrt.pop %v121
    %v174 = vmul.f32 %v173, %v121
    %v175 = vmul.f32 %v174, %v173
    %v176 = vmul.f32 0.5, %v175
    %v177 = vsub.f32 1.5, %v176
    %v178 = vmul.f32 %v173, %v177
    %vm179 = vweird.f32 %v121
    %vm180 = vweird.f32 %v173
    %vm181 = vmor %vm179, %vm180
    %v182 = vsel %vm181, %v173, %v178
    %v183 = vrsqrt.pop %v122
    %v184 = vmul.f32 %v183, %v122
    %v185 = vmul.f32 %v184, %v183
    %v186 = vmul.f32 0.5, %v185
    %v187 = vsub.f32 1.5, %v186
    %v188 = vmul.f32 %v183, %v187
    %vm189 = vweird.f32 %v122
    %vm190 = vweird.f32 %v183
    %vm191 = vmor %vm189, %vm190
    %v192 = vsel %vm191, %v183, %v188
    %v193 = vrsqrt.pop %v123
    %v194 = vmul.f32 %v193, %v123
    %v195 = vmul.f32 %v194, %v193
    %v196 = vmul.f32 0.5, %v195
    %v197 = vsub.f32 1.5, %v196
    %v198 = vmul.f32 %v193, %v197
    %vm199 = vweird.f32 %v123
    %vm200 = vweird.f32 %v193
    %vm201 = vmor %vm199, %vm200
    %v202 = vsel %vm201, %v193, %v198
    %v203 = vrsqrt.pop %v124
    %v204 = vmul.f32 %v203, %v124
    %v205 = vmul.f32 %v204, %v203
    %v206 = vmul.f32 0.5, %v205
    %v207 = vsub.f32 1.5, %v206
    %v208 = vmul.f32 %v203, %v207
    %vm209 = vweird.f32 %v124
    %vm210 = vweird.f32 %v203
    %vm211 = vmor %vm209, %vm210
    %v212 = vsel %vm211, %v203, %v208
    %v213 = vrsqrt.pop %v125
    %v214 = vmul.f32 %v213, %v125
    %v215 = vmul.f32 %v214, %v213
    %v216 = vmul.f32 0.5, %v215
    %v217 = vsub.f32 1.5, %v216
    %v218 = vmul.f32 %v213, %v217
    %vm219 = vweird.f32 %v125
    %vm220 = vweird.f32 %v213
    %vm221 = vmor %vm219, %vm220
    %v222 = vsel %vm221, %v213, %v218
    %v223 = vrsqrt.pop %v126
    %v224 = vmul.f32 %v223, %v126
    %v225 = vmul.f32 %v224, %v223
    %v226 = vmul.f32 0.5, %v225
    %v227 = vsub.f32 1.5, %v226
    %v228 = vmul.f32 %v223, %v227
    %vm229 = vweird.f32 %v126
    %vm230 = vweird.f32 %v223
    %vm231 = vmor %vm229, %vm230
    %v232 = vsel %vm231, %v223, %v228
    %v233 = vrsqrt.pop %v127
    %v234 = vmul.f32 %v233, %v127
    %v235 = vmul.f32 %v234, %v233
    %v236 = vmul.f32 0.5, %v235
    %v237 = vsub.f32 1.5, %v236
    %v238 = vmul.f32 %v233, %v237
    %vm239 = vweird.f32 %v127
    %vm240 = vweird.f32 %v233
    %vm241 = vmor %vm239, %vm240
    %v242 = vsel %vm241, %v233, %v238
    %v243 = vrsqrt.pop %v128
    %v244 = vmul.f32 %v243, %v128
    %v245 = vmul.f32 %v244, %v243
    %v246 = vmul.f32 0.5, %v245
    %v247 = vsub.f32 1.5, %v246
    %v248 = vmul.f32 %v243, %v247
    %vm249 = vweird.f32 %v128
    %vm250 = vweird.f32 %v243
    %vm251 = vmor %vm249, %vm250
    %v252 = vsel %vm251, %v243, %v248
    %v253 = vrsqrt.pop %v129
    %v254 = vmul.f32 %v253, %v129
    %v255 = vmul.f32 %v254, %v253
    %v256 = vmul.f32 0.5, %v255
    %v257 = vsub.f32 1.5, %v256
    %v258 = vmul.f32 %v253, %v257
    %vm259 = vweird.f32 %v129
    %vm260 = vweird.f32 %v253
    %vm261 = vmor %vm259, %vm260
    %v262 = vsel %vm261, %v253, %v258
    %v263 = vrsqrt.pop %v130
    %v264 = vmul.f32 %v263, %v130
    %v265 = vmul.f32 %v264, %v263
    %v266 = vmul.f32 0.5, %v265
    %v267 = vsub.f32 1.5, %v266
    %v268 = vmul.f32 %v263, %v267
    %vm269 = vweird.f32 %v130
    %vm270 = vweird.f32 %v263
    %vm271 = vmor %vm269, %vm270
    %v272 = vsel %vm271, %v263, %v268
    %v273 = vrsqrt.pop %v131
    %v274 = vmul.f32 %v273, %v131
    %v275 = vmul.f32 %v274, %v273
    %v276 = vmul.f32 0.5, %v275
    %v277 = vsub.f32 1.5, %v276
    %v278 = vmul.f32 %v273, %v277
    %vm279 = vweird.f32 %v131
    %vm280 = vweird.f32 %v273
    %vm281 = vmor %vm279, %vm280
    %v282 = vsel %vm281, %v273, %v278
    %v283 = vrsqrt.pop %v132
    %v284 = vmul.f32 %v283, %v132
    %v285 = vmul.f32 %v284, %v283
    %v286 = vmul.f32 0.5, %v285
    %v287 = vsub.f32 1.5, %v286
    %v288 = vmul.f32 %v283, %v287
    %vm289 = vweird.f32 %v132
    %vm290 = vweird.f32 %v283
    %vm291 = vmor %vm289, %vm290
    %v292 = vsel %vm291, %v283, %v288
    %v293 = vld [vmem:[#allocation2] sm:$0xff]
    %v295 = vsel %vm68, %v293, 0
    %v298 = vsel %vm68, %v36, 0
    %v301 = vsel %vm68, %v37, 0
    %v304 = vsel %vm68, %v38, 0
    %v307 = vsel %vm68, %v39, 0
    %v310 = vsel %vm68, %v40, 0
    %v313 = vsel %vm68, %v41, 0
    %v316 = vsel %vm68, %v42, 0
    %v319 = vsel %vm68, %v43, 0
    %v322 = vsel %vm68, %v44, 0
    %v325 = vsel %vm68, %v45, 0
    %v328 = vsel %vm68, %v46, 0
    %v331 = vsel %vm68, %v47, 0
    %v334 = vsel %vm68, %v48, 0
    %v337 = vsel %vm68, %v49, 0
    %v340 = vsel %vm68, %v50, 0
    %v343 = vsel %vm68, %v51, 0
    %345 = vmatpush.xpose.msra.mxu0 %v343
    %346 = vmatpush.xpose.msra.mxu0 %v340
    %347 = vmatpush.xpose.msra.mxu0 %v337
    %348 = vmatpush.xpose.msra.mxu0 %v334
    %349 = vmatpush.xpose.msra.mxu0 %v331
    %350 = vmatpush.xpose.msra.mxu0 %v328
    %351 = vmatpush.xpose.msra.mxu0 %v325
    %352 = vmatpush.xpose.msra.mxu0 %v322
    %353 = vmatpush.xpose.msra.mxu0 %v319
    %354 = vmatpush.xpose.msra.mxu0 %v316
    %355 = vmatpush.xpose.msra.mxu0 %v313
    %356 = vmatpush.xpose.msra.mxu0 %v310
    %357 = vmatpush.xpose.msra.mxu0 %v307
    %358 = vmatpush.xpose.msra.mxu0 %v304
    %359 = vmatpush.xpose.msra.mxu0 %v301
    %360 = vmatpush.xpose.msra.mxu0 %v298
    %361 = vmatmul.f32.gmra.mxu0 %v295
    %v362 = vpop.f32.mrf.mxu0
    %v363 = vadd.f32 0.0, %v362
    %364 = vdwg.mxu0
    %v381 = vlaneseq
    %v382 = vand.u32 %v381, 127
    %v383 = vperm.slane %v142, %v382
    %v384 = vadd.s32 %v382, 4294967288
    %v385 = vperm.slane %v152, %v384
    %vm386 = vcmask 130112
    %v387 = vsel %vm386, %v385, %v383
    %v388 = vadd.s32 %v382, 4294967280
    %v389 = vperm.slane %v162, %v388
    %vm390 = vcmask 195712
    %v391 = vsel %vm390, %v389, %v387
    %v392 = vadd.s32 %v382, 4294967272
    %v393 = vperm.slane %v172, %v392
    %vm394 = vcmask 261312
    %v395 = vsel %vm394, %v393, %v391
    %v396 = vadd.s32 %v382, 4294967264
    %v397 = vperm.slane %v182, %v396
    %vm398 = vcmask 326912
    %v399 = vsel %vm398, %v397, %v395
    %v400 = vadd.s32 %v382, 4294967256
    %v401 = vperm.slane %v192, %v400
    %vm402 = vcmask 392512
    %v403 = vsel %vm402, %v401, %v399
    %v404 = vadd.s32 %v382, 4294967248
    %v405 = vperm.slane %v202, %v404
    %vm406 = vcmask 458112
    %v407 = vsel %vm406, %v405, %v403
    %v408 = vadd.s32 %v382, 4294967240
    %v409 = vperm.slane %v212, %v408
    %vm410 = vcmask 523712
    %v411 = vsel %vm410, %v409, %v407
    %v412 = vadd.s32 %v382, 4294967232
    %v413 = vperm.slane %v222, %v412
    %vm414 = vcmask 589312
    %v415 = vsel %vm414, %v413, %v411
    %v416 = vadd.s32 %v382, 4294967224
    %v417 = vperm.slane %v232, %v416
    %vm418 = vcmask 654912
    %v419 = vsel %vm418, %v417, %v415
    %v420 = vadd.s32 %v382, 4294967216
    %v421 = vperm.slane %v242, %v420
    %vm422 = vcmask 720512
    %v423 = vsel %vm422, %v421, %v419
    %v424 = vadd.s32 %v382, 4294967208
    %v425 = vperm.slane %v252, %v424
    %vm426 = vcmask 786112
    %v427 = vsel %vm426, %v425, %v423
    %v428 = vadd.s32 %v382, 4294967200
    %v429 = vperm.slane %v262, %v428
    %vm430 = vcmask 851712
    %v431 = vsel %vm430, %v429, %v427
    %v432 = vadd.s32 %v382, 4294967192
    %v433 = vperm.slane %v272, %v432
    %vm434 = vcmask 917312
    %v435 = vsel %vm434, %v433, %v431
    %v436 = vadd.s32 %v382, 4294967184
    %v437 = vperm.slane %v282, %v436
    %vm438 = vcmask 982912
    %v439 = vsel %vm438, %v437, %v435
    %v440 = vadd.s32 %v382, 4294967176
    %v441 = vperm.slane %v292, %v440
    %vm442 = vcmask 1048512
    %v443 = vsel %vm442, %v441, %v439
    %vm444 = vcmask 1042434
    %v445 = vsel %vm444, %v443, %v443
    %vm446 = vcmask 1043459
    %v447 = vsel %vm446, %v443, %v445
    %vm448 = vcmask 1044484
    %v449 = vsel %vm448, %v443, %v447
    %vm450 = vcmask 1045509
    %v451 = vsel %vm450, %v443, %v449
    %vm452 = vcmask 1046534
    %v453 = vsel %vm452, %v443, %v451
    %vm454 = vcmask 1047559
    %v455 = vsel %vm454, %v443, %v453
    %v457 = vmul.f32 %v363, %v455
    %458 = vst [vmem:[#allocation3] sm:$0xff] %v457
    // Predicated region
    $region14: #{tpu_custom_call.1} parent=1 // pred_check
      _
    $region15: #{tpu_custom_call.1} parent=1 // pred_check_branch
      %460 = sbr.rel (0) target = $region17
    $region16: #{tpu_custom_call.1} parent=1 // pred_region
      %462 = vsyncadd [#allocation4], 0
      %s464 = sshll.u32 [#allocation3], 4
      %s465 = int_to_ptr.vmem [resolvable:$true] %s464
      %s466 = sshll.u32 %s2, 4
      %s467 = int_to_ptr.hbm [resolvable:$true] %s466
      %469 = dma.vmem_to_hbm [thread:$0]  %s465, 128, %s467, [#allocation4]
    $region17: #{tpu_custom_call.1} parent=1 // pred_fallthru
      _
    // Predicated region
    $region18: #{tpu_custom_call.1} parent=1 // pred_check
      _
    $region19: #{tpu_custom_call.1} parent=1 // pred_check_branch
      %471 = sbr.rel (0) target = $region21
    $region20: #{tpu_custom_call.1} parent=1 // pred_region
      %473 = dma.done [#allocation4], 128
    $region21: #{tpu_custom_call.1} parent=1 // pred_fallthru
      _
    %474 = vsyncpa [#allocation4], 1

</llo_original>
